<compile_context>
chip_gen: v6e
topology: v6e:2x2x1
jax: 0.10.0
libtpu: 0.0.40
codegen_flags: <defaults>
</compile_context>

<pallas_src>
import functools

import jax
import jax.numpy as jnp
from jax.experimental import pallas as pl
from jax.experimental.pallas import tpu as pltpu


def _round_up(v, m):
    return ((v + m - 1) // m) * m


def _deconv_matmul_kernel(x_ref, w_ref, b_ref, o_ref):
    # x_ref: (Cin, tm)    -- voxels on lanes (lane-dense)
    # w_ref: (Nout, Cin)  -- grid-invariant, resident across the grid
    # b_ref: (Nout, 1)    -- f32 bias, broadcast over lanes
    # o_ref: (Nout, tm)   -- lane-dense output tile
    acc = jnp.dot(w_ref[...], x_ref[...], preferred_element_type=jnp.float32)
    o_ref[...] = (acc + b_ref[...]).astype(o_ref.dtype)


@functools.partial(jax.jit, static_argnames=("stride", "tm", "compute_dtype"))
def deconv3d_pallas(x, weight, bias, *, stride=2, tm=1024, compute_dtype=None):
    """ConvTranspose3d with kernel_size == stride, padding == 0 (the UNETR case).

    x:      (N, Cin, D, H, W)          -- NCDHW
    weight: (Cin, Cout, k, k, k)       -- PyTorch ConvTranspose3d weight layout
    bias:   (Cout,)
    returns (N, Cout, D*k, H*k, W*k)   -- NCDHW
    """
    N, Cin, D, H, W = x.shape
    Cin_w, Cout, kD, kH, kW = weight.shape
    assert Cin == Cin_w
    assert kD == kH == kW == stride, (
        "kernel implements the UNETR case kernel_size == stride, padding == 0"
    )
    # TODO(synk): general kernel_size != stride / padding != 0 needs an overlap-add
    # scatter; not required by the UNETR Deconv3DLayer usage.
    k3 = kD * kH * kW
    Nout = Cout * k3
    DHW = D * H * W

    out_dtype = x.dtype
    if compute_dtype is not None:
        x = x.astype(compute_dtype)
        weight = weight.astype(compute_dtype)

    # Free (contiguity-preserving) reshapes -- no transpose / pad of x in HBM.
    x3 = x.reshape(N, Cin, DHW)                    # voxel axis last -> lanes
    w2 = weight.reshape(Cin, Nout).T               # (Nout, Cin); row = co*k^3 + kd*k^2 + kh*k + kw
    b2 = jnp.repeat(bias.astype(jnp.float32), k3).reshape(Nout, 1)

    # ---- pick a lane-dense voxel tile that fits VMEM (v7x has only 64 MiB/TC) ----
    x_bytes = jnp.dtype(x.dtype).itemsize
    o_bytes = jnp.dtype(out_dtype).itemsize
    vmem_budget = 44 * 1024 * 1024  # conservative double-buffered budget for all gens

    def vmem_estimate(t):
        t_pad = _round_up(t, 128)
        est = 2 * _round_up(Cin, 8) * t_pad * x_bytes                    # x tile (x2 buf)
        est += 2 * _round_up(Nout, 8) * t_pad * o_bytes                  # out tile (x2 buf)
        est += 2 * _round_up(Nout, 8) * _round_up(Cin, 128) * x_bytes    # resident weight
        est += 2 * _round_up(Nout, 8) * 128 * 4                          # bias
        return est

    if DHW <= tm:
        tm_eff = DHW                              # single full-extent tile (always legal)
    else:
        tm_eff = max(128, (tm // 128) * 128)      # lane-dense multiple of 128
    while tm_eff > 128 and DHW > tm_eff and vmem_estimate(tm_eff) > vmem_budget:
        tm_eff -= 128
    grid_j = pl.cdiv(DHW, tm_eff)                 # ragged last tile handled by masking
    # TODO(synk): very large Cin*Nout (weight alone > ~20 MiB) would want a K-split
    # grid axis with an f32 accumulator; not needed for UNETR channel counts.

    vmem_limit = int(min(max(vmem_estimate(tm_eff) * 1.3 + (2 << 20), 32 << 20), 64 << 20))

    cost = pl.CostEstimate(
        flops=2 * N * Nout * Cin * DHW,
        transcendentals=0,
        bytes_accessed=int(x3.size * x_bytes + w2.size * x_bytes + b2.size * 4
                           + N * Nout * DHW * o_bytes),
    )

    y = pl.pallas_call(
        _deconv_matmul_kernel,
        out_shape=jax.ShapeDtypeStruct((N, Nout, DHW), out_dtype),
        grid_spec=pltpu.PrefetchScalarGridSpec(
            num_scalar_prefetch=0,
            grid=(N, grid_j),
            in_specs=[
                pl.BlockSpec((None, Cin, tm_eff), lambda n, j: (n, 0, j)),
                pl.BlockSpec((Nout, Cin), lambda n, j: (0, 0)),
                pl.BlockSpec((Nout, 1), lambda n, j: (0, 0)),
            ],
            out_specs=pl.BlockSpec((None, Nout, tm_eff), lambda n, j: (n, 0, j)),
        ),
        compiler_params=pltpu.CompilerParams(
            dimension_semantics=("parallel", "parallel"),
            vmem_limit_bytes=vmem_limit,
        ),
        cost_estimate=cost,
    )(x3, w2, b2)

    # Scatter back to NCDHW: reshapes are free, the single 8-D transpose is the only
    # extra HBM pass (kept in XLA; an in-kernel fuse would need strided lane stores).
    y = y.reshape(N, Cout, kD, kH, kW, D, H, W)
    y = jnp.transpose(y, (0, 1, 5, 2, 6, 3, 7, 4))
    return y.reshape(N, Cout, D * kD, H * kH, W * kW)


def deconv3d_ref(x, weight, bias, stride=2):
    """Pure-JAX reference: ConvTranspose3d == dilated conv with flipped kernel."""
    k = weight.shape[2]
    w_rot = weight[:, :, ::-1, ::-1, ::-1]                 # flip spatial dims
    w_oidhw = jnp.transpose(w_rot, (1, 0, 2, 3, 4))        # (Cout, Cin, k, k, k)
    pad = k - 1                                            # padding = 0 -> k-1-0
    y = jax.lax.conv_general_dilated(
        x,
        w_oidhw,
        window_strides=(1, 1, 1),
        padding=[(pad, pad)] * 3,
        lhs_dilation=(stride, stride, stride),
        dimension_numbers=("NCDHW", "OIDHW", "NCDHW"),
    )
    return y + bias.reshape(1, -1, 1, 1, 1)


if __name__ == "__main__":
    # Small shapes consistent with the UNETR deconv: in=4, out=8, k=stride=2.
    N, Cin, Cout, D, H, W = 2, 4, 8, 8, 8, 8
    k = 2
    stride = 2

    key = jax.random.PRNGKey(0)
    kx, kw, kb = jax.random.split(key, 3)
    x = jax.random.normal(kx, (N, Cin, D, H, W), dtype=jnp.float32)
    # Deterministic param init (shapes match nn.ConvTranspose3d(Cin, Cout, k)).
    fan = Cin * k * k * k
    bound = 1.0 / (fan ** 0.5)
    weight = jax.random.uniform(kw, (Cin, Cout, k, k, k), jnp.float32, -bound, bound)
    bias = jax.random.uniform(kb, (Cout,), jnp.float32, -bound, bound)

    # tm=256 exercises a multi-tile grid along the voxel axis (D*H*W = 512).
    out = deconv3d_pallas(x, weight, bias, stride=stride, tm=256)
    out = jax.block_until_ready(out)

    ref = deconv3d_ref(x, weight, bias, stride=stride)
    assert out.shape == (N, Cout, D * stride, H * stride, W * stride), out.shape
    assert jnp.allclose(out, ref, atol=1e-5, rtol=1e-5), "mismatch vs reference"

    print("KERNEL_OK")
</pallas_src>

<mosaic_0001>
module attributes {stable_mosaic.version = 11 : i64} {
  func.func @_deconv_matmul_kernel(%arg0: i32, %arg1: i32, %arg2: memref<1x4x256xf32, #tpu.memory_space<vmem>>, %arg3: memref<64x4xf32, #tpu.memory_space<vmem>>, %arg4: memref<64x1xf32, #tpu.memory_space<vmem>>, %arg5: memref<1x64x256xf32, #tpu.memory_space<vmem>>) attributes {dimension_semantics = [#tpu.dimension_semantics<parallel>, #tpu.dimension_semantics<parallel>], iteration_bounds = array<i64: 2, 2>, scalar_prefetch = 0 : i64, scratch_operands = 0 : i64, tpu.core_type = #tpu.core_type<tc>, window_params = [{transform_indices = @transform_0, window_bounds = array<i64: 1, 4, 256>}, {pipeline_mode = #tpu.pipeline_mode<synchronous>, transform_indices = @transform_1, window_bounds = array<i64: 64, 4>}, {pipeline_mode = #tpu.pipeline_mode<synchronous>, transform_indices = @transform_2, window_bounds = array<i64: 64, 1>}, {transform_indices = @transform_3, window_bounds = array<i64: 1, 64, 256>}]} {
    %c0 = arith.constant 0 : index
    %c0_0 = arith.constant 0 : index
    %0 = vector.load %arg3[%c0, %c0_0] : memref<64x4xf32, #tpu.memory_space<vmem>>, vector<64x4xf32>
    %c0_1 = arith.constant 0 : index
    %c0_2 = arith.constant 0 : index
    %c0_3 = arith.constant 0 : index
    %1 = vector.load %arg2[%c0_1, %c0_2, %c0_3] : memref<1x4x256xf32, #tpu.memory_space<vmem>>, vector<1x4x256xf32>
    %2 = vector.shape_cast %1 : vector<1x4x256xf32> to vector<4x256xf32>
    %cst = arith.constant dense<0.000000e+00> : vector<64x256xf32>
    %3 = tpu.matmul %0, %2, %cst {dimension_numbers = #tpu.dot_dimension_numbers<[1], [0], [0], [1], [0, 0, 1, 1], [], []>} : vector<64x4xf32>, vector<4x256xf32>, vector<64x256xf32> -> vector<64x256xf32>
    %c0_4 = arith.constant 0 : index
    %c0_5 = arith.constant 0 : index
    %4 = vector.load %arg4[%c0_4, %c0_5] : memref<64x1xf32, #tpu.memory_space<vmem>>, vector<64x1xf32>
    %5 = vector.broadcast %4 : vector<64x1xf32> to vector<64x256xf32>
    %6 = arith.addf %3, %5 : vector<64x256xf32>
    %c0_6 = arith.constant 0 : index
    %c0_7 = arith.constant 0 : index
    %c0_8 = arith.constant 0 : index
    %7 = vector.load %arg5[%c0_6, %c0_7, %c0_8] : memref<1x64x256xf32, #tpu.memory_space<vmem>>, vector<1x64x256xf32>
    %8 = vector.shape_cast %7 : vector<1x64x256xf32> to vector<64x256xf32>
    %9 = vector.shape_cast %6 : vector<64x256xf32> to vector<1x64x256xf32>
    tpu.vector_store %arg5[%c0_6, %c0_7, %c0_8], %9 {strides = array<i32>} : memref<1x64x256xf32, #tpu.memory_space<vmem>>, vector<1x64x256xf32>,
    return
  }
  func.func @transform_0(%arg0: i32, %arg1: i32) -> (i32, i32, i32) {
    %c0_i32 = arith.constant 0 : i32
    %c0_i32_0 = arith.constant 0 : i32
    return %arg0, %c0_i32, %arg1 : i32, i32, i32
  }
  func.func @transform_1(%arg0: i32, %arg1: i32) -> (i32, i32) {
    %c0_i32 = arith.constant 0 : i32
    %c0_i32_0 = arith.constant 0 : i32
    %c0_i32_1 = arith.constant 0 : i32
    return %c0_i32, %c0_i32_0 : i32, i32
  }
  func.func @transform_2(%arg0: i32, %arg1: i32) -> (i32, i32) {
    %c0_i32 = arith.constant 0 : i32
    %c0_i32_0 = arith.constant 0 : i32
    %c0_i32_1 = arith.constant 0 : i32
    return %c0_i32, %c0_i32_0 : i32, i32
  }
  func.func @transform_3(%arg0: i32, %arg1: i32) -> (i32, i32, i32) {
    %c0_i32 = arith.constant 0 : i32
    %c0_i32_0 = arith.constant 0 : i32
    return %arg0, %c0_i32, %arg1 : i32, i32, i32
  }
}

</mosaic_0001>

<llo_original>
// kernel: deconv3d_pallas.1
$region0: #{deconv3d_pallas.1}
  #allocation0 [shape = 'u32[]', space=smem, size = 0x4, offset = 0x4, fixed_abs, tag = 'smem constant byte address 0x4 - core index']
  #allocation1 [shape = 'u32[144,128]{1,0:T(1,128)}', space=vmem, size = 0x12000, scoped, tag = 'internal scratch']
  %s0 = inlined_call_operand.vmem [shape: f32[2,4,512], index: 0, kind: input, shape index: {}]
  %s1 = inlined_call_operand.vmem [shape: f32[64,4], index: 1, kind: input, shape index: {}]
  %s2 = inlined_call_operand.vmem [shape: f32[64,1], index: 2, kind: input, shape index: {}]
  %s3 = inlined_call_operand.vmem [shape: f32[2,64,512], index: 3, kind: output, shape index: {}]
  %s4 = sld [smem:[#allocation0]]
  $region64: #{deconv3d_pallas.1} parent=0
    _
  %s6 = ssub.s32 1, %s4
  %s7 = scalar_select 0, %s6, %s4
  $region1: #{deconv3d_pallas.1} parent=0
    #allocation2 [shape = 'u8[131072]{0}', space=vmem, size = 0x20000, scoped, tag = 'output window, operand 0']
    loop: start=0, step=1, limit=6
    $region2: #{deconv3d_pallas.1} parent=1 // loop_pre_header
      _
    $region3: #{deconv3d_pallas.1} parent=1 // loop_header
      %s9 = sphi 0, %s13
      %p10 = scmp.ge.s32.totalorder %s9, 6
      %s16 = sphi 0, %s28
      %s17 = sphi 0, %s24
      %s18 = sphi 0, %s16
      %s19 = sphi 0, %s17
      %s20 = sphi 0, %s18
      %s21 = sphi 0, %s19
      %s33 = sphi 0, %s35
      %s36 = sphi 0, %s33
      %s37 = sphi 0, %s36
      %s53 = sphi 0, %s37
      %s57 = sphi 0, %s57
      %s59 = sphi 0, %s57
      %s60 = sphi 0, %s59
      %s74 = sphi 0, %s60
      %s78 = sphi 0, %s78
      %s80 = sphi 0, %s78
      %s81 = sphi 0, %s80
      %s95 = sphi 0, %s81
      %s103 = sphi 0, %s105
      %s106 = sphi 0, %s103
      %s107 = sphi 0, %s106
      %s123 = sphi 0, %s107
    $region4: #{deconv3d_pallas.1} parent=1 // loop_header_branch
      %12 = sbr.rel (%p10) target = $region8
    $region5: #{deconv3d_pallas.1} parent=1 // loop_body
      %s14 = ssub.s32 %s9, 1
      %s15 = ssub.s32 %s9, 2
      %s22 = sadd.s32 1, %s17
      %p23 = scmp.ge.s32.totalorder %s22, 2
      %s24 = scalar_select %p23, 0, %s22
      %s25 = sadd.s32 1, %s16
      %s26 = scalar_select %p23, %s25, %s16
      %p27 = scmp.ge.s32.totalorder %s26, 2
      %s28 = scalar_select %p27, 0, %s26
      %s29 = ssub.s32 %s16, %s28
      %s30 = ssub.s32 %s17, %s24
      %s31 = sor.u32 %s29, %s30
      %p32 = scmp.eq.s32.totalorder %s31, 0
      %s34 = sadd.s32 %s33, 1
      %s35 = scalar_select %p32, %s33, %s34
      %p38 = pneg %p32
      %p39 = scmp.eq.s32.totalorder %s9, 3
      %p40 = por %p38, %p39
      %p41 = scmp.ne.s32.totalorder %s33, %s36
      %p42 = scmp.eq.s32.totalorder %s9, 0
      %p43 = por %p41, %p42
      %p44 = scmp.ne.s32.totalorder %s33, %s36
      %p45 = scmp.eq.s32.totalorder %s14, 3
      %p46 = por %p44, %p45
      %p47 = scmp.ne.s32.totalorder %s36, %s37
      %p48 = scmp.eq.s32.totalorder %s14, 0
      %p49 = por %p47, %p48
      %p50 = scmp.ne.s32.totalorder %s36, %s37
      %p51 = scmp.eq.s32.totalorder %s15, 3
      %p52 = por %p50, %p51
      %p54 = scmp.ne.s32.totalorder %s37, %s53
      %p55 = scmp.eq.s32.totalorder %s15, 0
      %p56 = por %p54, %p55
      %s58 = sadd.s32 %s57, 1
      %p61 = scmp.eq.s32.totalorder %s9, 3
      %p62 = scmp.ne.s32.totalorder %s57, %s59
      %p63 = scmp.eq.s32.totalorder %s9, 0
      %p64 = por %p62, %p63
      %p65 = scmp.ne.s32.totalorder %s57, %s59
      %p66 = scmp.eq.s32.totalorder %s14, 3
      %p67 = por %p65, %p66
      %p68 = scmp.ne.s32.totalorder %s59, %s60
      %p69 = scmp.eq.s32.totalorder %s14, 0
      %p70 = por %p68, %p69
      %p71 = scmp.ne.s32.totalorder %s59, %s60
      %p72 = scmp.eq.s32.totalorder %s15, 3
      %p73 = por %p71, %p72
      %p75 = scmp.ne.s32.totalorder %s60, %s74
      %p76 = scmp.eq.s32.totalorder %s15, 0
      %p77 = por %p75, %p76
      %s79 = sadd.s32 %s78, 1
      %p82 = scmp.eq.s32.totalorder %s9, 3
      %p83 = scmp.ne.s32.totalorder %s78, %s80
      %p84 = scmp.eq.s32.totalorder %s9, 0
      %p85 = por %p83, %p84
      %p86 = scmp.ne.s32.totalorder %s78, %s80
      %p87 = scmp.eq.s32.totalorder %s14, 3
      %p88 = por %p86, %p87
      %p89 = scmp.ne.s32.totalorder %s80, %s81
      %p90 = scmp.eq.s32.totalorder %s14, 0
      %p91 = por %p89, %p90
      %p92 = scmp.ne.s32.totalorder %s80, %s81
      %p93 = scmp.eq.s32.totalorder %s15, 3
      %p94 = por %p92, %p93
      %p96 = scmp.ne.s32.totalorder %s81, %s95
      %p97 = scmp.eq.s32.totalorder %s15, 0
      %p98 = por %p96, %p97
      %s99 = ssub.s32 %s16, %s28
      %s100 = ssub.s32 %s17, %s24
      %s101 = sor.u32 %s99, %s100
      %p102 = scmp.eq.s32.totalorder %s101, 0
      %s104 = sadd.s32 %s103, 1
      %s105 = scalar_select %p102, %s103, %s104
      %p108 = pneg %p102
      %p109 = scmp.eq.s32.totalorder %s9, 3
      %p110 = por %p108, %p109
      %p111 = scmp.ne.s32.totalorder %s103, %s106
      %p112 = scmp.eq.s32.totalorder %s9, 0
      %p113 = por %p111, %p112
      %p114 = scmp.ne.s32.totalorder %s103, %s106
      %p115 = scmp.eq.s32.totalorder %s14, 3
      %p116 = por %p114, %p115
      %p117 = scmp.ne.s32.totalorder %s106, %s107
      %p118 = scmp.eq.s32.totalorder %s14, 0
      %p119 = por %p117, %p118
      %p120 = scmp.ne.s32.totalorder %s106, %s107
      %p121 = scmp.eq.s32.totalorder %s15, 3
      %p122 = por %p120, %p121
      %p124 = scmp.ne.s32.totalorder %s107, %s123
      %p125 = scmp.eq.s32.totalorder %s15, 0
      %p126 = por %p124, %p125
      %p127 = scmp.le.s32.totalorder 1, %s9
      %p128 = scmp.lt.s32.totalorder %s9, 5
      %p129 = pnand %p127, %p128
      %p130 = pneg %p129
      // Predicated region
      $region9: #{deconv3d_pallas.1} parent=5 // pred_check
        _
      $region10: #{deconv3d_pallas.1} parent=5 // pred_check_branch
        %132 = sbr.rel (%p129) target = $region12
      $region11: #{deconv3d_pallas.1} parent=5 // pred_region
        %s133 = ssub.s32 %s9, 1
        // Predicated region
        $region13: #{deconv3d_pallas.1} parent=11 // pred_check
          %p134 = pneg %p70
        $region14: #{deconv3d_pallas.1} parent=11 // pred_check_branch
          %136 = sbr.rel (%p134) target = $region16
        $region15: #{deconv3d_pallas.1} parent=11 // pred_region
          _
        $region16: #{deconv3d_pallas.1} parent=11 // pred_fallthru
          _
        // Predicated region
        $region17: #{deconv3d_pallas.1} parent=11 // pred_check
          %p137 = pneg %p91
        $region18: #{deconv3d_pallas.1} parent=11 // pred_check_branch
          %139 = sbr.rel (%p137) target = $region20
        $region19: #{deconv3d_pallas.1} parent=11 // pred_region
          _
        $region20: #{deconv3d_pallas.1} parent=11 // pred_fallthru
          _
      $region12: #{deconv3d_pallas.1} parent=5 // pred_fallthru
        _
      %p140 = scmp.lt.s32.totalorder %s9, 4
      // Predicated region
      $region21: #{deconv3d_pallas.1} parent=5 // pred_check
        %p141 = pneg %p140
      $region22: #{deconv3d_pallas.1} parent=5 // pred_check_branch
        %143 = sbr.rel (%p141) target = $region24
      $region23: #{deconv3d_pallas.1} parent=5 // pred_region
        // Predicated region
        $region25: #{deconv3d_pallas.1} parent=23 // pred_check
          %p144 = pneg %p43
        $region26: #{deconv3d_pallas.1} parent=23 // pred_check_branch
          %146 = sbr.rel (%p144) target = $region28
        $region27: #{deconv3d_pallas.1} parent=23 // pred_region
          %s147 = smul.u32 2, %s17
          %p148 = scmp.lt.s32.totalorder %s16, 1
          %s149 = scalar_select %p148, %s16, 1
          %p150 = scmp.lt.s32.totalorder %s147, 3
          %s151 = scalar_select %p150, %s147, 3
          %s152 = smul.addr %s149, 4
          %s153 = sadd.s32 %s151, %s152
          %s154 = smul.addr %s153, 4
          %s155 = scalar_lea.vmem %s0, %s154
          %s156 = smul.u32 2, %s17
        $region28: #{deconv3d_pallas.1} parent=23 // pred_fallthru
          _
      $region24: #{deconv3d_pallas.1} parent=5 // pred_fallthru
        _
      %p157 = scmp.le.s32.totalorder 1, %s9
      %p158 = scmp.lt.s32.totalorder %s9, 5
      %p159 = pnand %p157, %p158
      %p160 = pneg %p159
      // Predicated region
      $region29: #{deconv3d_pallas.1} parent=5 // pred_check
        _
      $region30: #{deconv3d_pallas.1} parent=5 // pred_check_branch
        %162 = sbr.rel (%p159) target = $region32
      $region31: #{deconv3d_pallas.1} parent=5 // pred_region
        %s163 = ssub.s32 %s9, 1
        %s164 = smul.u32 2, %s19
        %p165 = scmp.lt.s32.totalorder %s18, 1
        %s166 = scalar_select %p165, %s18, 1
        %p167 = scmp.lt.s32.totalorder %s164, 3
        %s168 = scalar_select %p167, %s164, 3
        %s169 = smul.addr %s166, 4
        %s170 = sadd.s32 %s168, %s169
        %s171 = smul.addr %s170, 4
        %s172 = scalar_lea.vmem %s0, %s171
        %p173 = pneg %p49
        %p174 = pneg %p46
        %p175 = pneg %p70
        %p176 = pneg %p67
        %p177 = pneg %p91
        %p178 = pneg %p88
        %p179 = pneg %p119
        %p180 = pneg %p116
        %s181 = sand.u32 %s106, 1
        %s182 = sand.u32 %s106, 1
        %s183 = smul.addr %s182, 128
        %s184 = scalar_lea.vmem [#allocation2], %s183
        %s185 = smul.u32 2, %s19
        %p186 = scmp.lt.s32.totalorder %s18, 1
        %s187 = scalar_select %p186, %s18, 1
        %p188 = scmp.lt.s32.totalorder %s185, 3
        %s189 = scalar_select %p188, %s185, 3
        %s190 = smul.addr %s187, 4
        %s191 = sadd.s32 %s189, %s190
        %s192 = smul.addr %s191, 4
        %s193 = scalar_lea.vmem %s0, %s192
        %s194 = smul.u32 2, %s19
        %s195 = smul.u32 2, %s19
        %v196 = vld [vmem:[%s1] sm:$0xff]
        %v197 = vld [vmem:[%s1 + $0x8] sm:$0xff]
        %v198 = vld [vmem:[%s1 + $0x10] sm:$0xff]
        %v199 = vld [vmem:[%s1 + $0x18] sm:$0xff]
        %v200 = vld [vmem:[%s1 + $0x20] sm:$0xff]
        %v201 = vld [vmem:[%s1 + $0x28] sm:$0xff]
        %v202 = vld [vmem:[%s1 + $0x30] sm:$0xff]
        %v203 = vld [vmem:[%s1 + $0x38] sm:$0xff]
        %v204 = vld [vmem:[%s193] sm:$0xff]
        %v205 = vld [vmem:[%s2] sm:$0xff]
        %v206 = vld [vmem:[%s2 + $0x8] sm:$0xff]
        %v207 = vld [vmem:[%s2 + $0x10] sm:$0xff]
        %v208 = vld [vmem:[%s2 + $0x18] sm:$0xff]
        %v209 = vld [vmem:[%s2 + $0x20] sm:$0xff]
        %v210 = vld [vmem:[%s2 + $0x28] sm:$0xff]
        %v211 = vld [vmem:[%s2 + $0x30] sm:$0xff]
        %v212 = vld [vmem:[%s2 + $0x38] sm:$0xff]
        %214 = vset.pattern.permute.xlu0 0
        %215 = vperm.xlu0 %214, %v205
        %v216 = vpop.permute.xlu0 %215
        %219 = vset.pattern.permute.xlu0 0
        %220 = vperm.xlu0 %219, %v206
        %v221 = vpop.permute.xlu0 %220
        %224 = vset.pattern.permute.xlu0 0
        %225 = vperm.xlu0 %224, %v207
        %v226 = vpop.permute.xlu0 %225
        %229 = vset.pattern.permute.xlu0 0
        %230 = vperm.xlu0 %229, %v208
        %v231 = vpop.permute.xlu0 %230
        %234 = vset.pattern.permute.xlu0 0
        %235 = vperm.xlu0 %234, %v209
        %v236 = vpop.permute.xlu0 %235
        %239 = vset.pattern.permute.xlu0 0
        %240 = vperm.xlu0 %239, %v210
        %v241 = vpop.permute.xlu0 %240
        %244 = vset.pattern.permute.xlu0 0
        %245 = vperm.xlu0 %244, %v211
        %v246 = vpop.permute.xlu0 %245
        %249 = vset.pattern.permute.xlu0 0
        %250 = vperm.xlu0 %249, %v212
        %v251 = vpop.permute.xlu0 %250
        %v254 = vcombine.high %v204, %v204
        %vm255 = vcmask 31744
        %v257 = vsel %vm255, %v196, 0
        %v260 = vsel %vm255, %v197, 0
        %v263 = vsel %vm255, %v198, 0
        %v266 = vsel %vm255, %v199, 0
        %v269 = vsel %vm255, %v200, 0
        %v272 = vsel %vm255, %v201, 0
        %v275 = vsel %vm255, %v202, 0
        %v278 = vsel %vm255, %v203, 0
        %vm280 = vcmask 1043456
        %v281 = vsel %vm280, %v204, 0
        %v283 = vsel %vm280, %v254, 0
        %285 = vmatprep.subr.mxu0 0.0
        %286 = vmatpush1.msra.mxu0 0.0
        %287 = vmatprep.subr.mxu0 0.0
        %288 = vmatpush1.msra.mxu0 0.0
        %289 = vmatprep.subr.mxu0 0.0
        %290 = vmatpush1.msra.mxu0 0.0
        %291 = vmatprep.subr.mxu0 0.0
        %292 = vmatpush1.msra.mxu0 0.0
        %293 = vmatprep.subr.mxu0 0.0
        %294 = vmatpush1.msra.mxu0 0.0
        %295 = vmatprep.subr.mxu0 0.0
        %296 = vmatpush1.msra.mxu0 0.0
        %297 = vmatprep.subr.mxu0 0.0
        %298 = vmatpush1.msra.mxu0 0.0
        %299 = vmatprep.subr.mxu0 0.0
        %300 = vmatpush1.msra.mxu0 0.0
        %301 = vmatprep.subr.mxu0 0.0
        %302 = vmatpush1.msra.mxu0 0.0
        %303 = vmatprep.subr.mxu0 0.0
        %304 = vmatpush1.msra.mxu0 0.0
        %305 = vmatprep.subr.mxu0 0.0
        %306 = vmatpush1.msra.mxu0 0.0
        %307 = vmatprep.subr.mxu0 0.0
        %308 = vmatpush1.msra.mxu0 0.0
        %309 = vmatprep.subr.mxu0 0.0
        %310 = vmatpush1.msra.mxu0 0.0
        %311 = vmatprep.subr.mxu0 0.0
        %312 = vmatpush1.msra.mxu0 0.0
        %313 = vmatprep.subr.mxu0 0.0
        %314 = vmatpush1.msra.mxu0 0.0
        %315 = vmatprep.subr.mxu0 %v283
        %316 = vmatpush1.msra.mxu0 %v281
        %317 = vmatprep.subr.mxu0 0.0
        %318 = vmatpush2.msra.mxu0 0.0
        %319 = vmatprep.subr.mxu0 0.0
        %320 = vmatpush2.msra.mxu0 0.0
        %321 = vmatprep.subr.mxu0 0.0
        %322 = vmatpush2.msra.mxu0 0.0
        %323 = vmatprep.subr.mxu0 0.0
        %324 = vmatpush2.msra.mxu0 0.0
        %325 = vmatprep.subr.mxu0 0.0
        %326 = vmatpush2.msra.mxu0 0.0
        %327 = vmatprep.subr.mxu0 0.0
        %328 = vmatpush2.msra.mxu0 0.0
        %329 = vmatprep.subr.mxu0 0.0
        %330 = vmatpush2.msra.mxu0 0.0
        %331 = vmatprep.subr.mxu0 0.0
        %332 = vmatpush2.msra.mxu0 0.0
        %333 = vmatprep.subr.mxu0 0.0
        %334 = vmatpush2.msra.mxu0 0.0
        %335 = vmatprep.subr.mxu0 0.0
        %336 = vmatpush2.msra.mxu0 0.0
        %337 = vmatprep.subr.mxu0 0.0
        %338 = vmatpush2.msra.mxu0 0.0
        %339 = vmatprep.subr.mxu0 0.0
        %340 = vmatpush2.msra.mxu0 0.0
        %341 = vmatprep.subr.mxu0 0.0
        %342 = vmatpush2.msra.mxu0 0.0
        %343 = vmatprep.subr.mxu0 0.0
        %344 = vmatpush2.msra.mxu0 0.0
        %345 = vmatprep.subr.mxu0 0.0
        %346 = vmatpush2.msra.mxu0 0.0
        %347 = vmatprep.subr.mxu0 0.0
        %348 = vmatpush2.msra.mxu0 0.0
        %349 = vmatprep.mubr.f32.mxu0 0.0
        %350 = vmatmul.mubr.f32.gmra.mxu0 %v257
        %v351 = vpop.f32.mrf.mxu0
        %v352 = vadd.f32 %v216, %v351
        %v353 = vpop.f32.mrf.mxu0
        %v354 = vadd.f32 %v216, %v353
        %355 = vmatprep.mubr.f32.mxu0 0.0
        %356 = vmatmul.mubr.f32.gmra.mxu0 %v260
        %v357 = vpop.f32.mrf.mxu0
        %v358 = vadd.f32 %v221, %v357
        %v359 = vpop.f32.mrf.mxu0
        %v360 = vadd.f32 %v221, %v359
        %361 = vmatprep.mubr.f32.mxu0 0.0
        %362 = vmatmul.mubr.f32.gmra.mxu0 %v263
        %v363 = vpop.f32.mrf.mxu0
        %v364 = vadd.f32 %v226, %v363
        %v365 = vpop.f32.mrf.mxu0
        %v366 = vadd.f32 %v226, %v365
        %367 = vmatprep.mubr.f32.mxu0 0.0
        %368 = vmatmul.mubr.f32.gmra.mxu0 %v266
        %v369 = vpop.f32.mrf.mxu0
        %v370 = vadd.f32 %v231, %v369
        %v371 = vpop.f32.mrf.mxu0
        %v372 = vadd.f32 %v231, %v371
        %373 = vmatprep.mubr.f32.mxu0 0.0
        %374 = vmatmul.mubr.f32.gmra.mxu0 %v269
        %v375 = vpop.f32.mrf.mxu0
        %v376 = vadd.f32 %v236, %v375
        %v377 = vpop.f32.mrf.mxu0
        %v378 = vadd.f32 %v236, %v377
        %379 = vmatprep.mubr.f32.mxu0 0.0
        %380 = vmatmul.mubr.f32.gmra.mxu0 %v272
        %v381 = vpop.f32.mrf.mxu0
        %v382 = vadd.f32 %v241, %v381
        %v383 = vpop.f32.mrf.mxu0
        %v384 = vadd.f32 %v241, %v383
        %385 = vmatprep.mubr.f32.mxu0 0.0
        %386 = vmatmul.mubr.f32.gmra.mxu0 %v275
        %v387 = vpop.f32.mrf.mxu0
        %v388 = vadd.f32 %v246, %v387
        %v389 = vpop.f32.mrf.mxu0
        %v390 = vadd.f32 %v246, %v389
        %391 = vmatprep.mubr.f32.mxu0 0.0
        %392 = vmatmul.mubr.f32.gmra.mxu0 %v278
        %v393 = vpop.f32.mrf.mxu0
        %v394 = vadd.f32 %v251, %v393
        %v395 = vpop.f32.mrf.mxu0
        %v396 = vadd.f32 %v251, %v395
        %397 = vdwg.mxu0
        %398 = vst [vmem:[%s184] sm:$0xff] %v352
        %399 = vst [vmem:[%s184 + $0x8] sm:$0xff] %v354
        %400 = vst [vmem:[%s184 + $0x10] sm:$0xff] %v358
        %401 = vst [vmem:[%s184 + $0x18] sm:$0xff] %v360
        %402 = vst [vmem:[%s184 + $0x20] sm:$0xff] %v364
        %403 = vst [vmem:[%s184 + $0x28] sm:$0xff] %v366
        %404 = vst [vmem:[%s184 + $0x30] sm:$0xff] %v370
        %405 = vst [vmem:[%s184 + $0x38] sm:$0xff] %v372
        %406 = vst [vmem:[%s184 + $0x40] sm:$0xff] %v376
        %407 = vst [vmem:[%s184 + $0x48] sm:$0xff] %v378
        %408 = vst [vmem:[%s184 + $0x50] sm:$0xff] %v382
        %409 = vst [vmem:[%s184 + $0x58] sm:$0xff] %v384
        %410 = vst [vmem:[%s184 + $0x60] sm:$0xff] %v388
        %411 = vst [vmem:[%s184 + $0x68] sm:$0xff] %v390
        %412 = vst [vmem:[%s184 + $0x70] sm:$0xff] %v394
        %413 = vst [vmem:[%s184 + $0x78] sm:$0xff] %v396
        %s414 = sand.u32 %s106, 1
        %s415 = sand.u32 %s106, 1
        %s416 = smul.addr %s415, 128
        %s417 = scalar_lea.vmem [#allocation2], %s416
        // Predicated region
        $region33: #{deconv3d_pallas.1} parent=31 // pred_check
          %p418 = pneg %p116
        $region34: #{deconv3d_pallas.1} parent=31 // pred_check_branch
          %420 = sbr.rel (%p418) target = $region36
        $region35: #{deconv3d_pallas.1} parent=31 // pred_region
          %s421 = smul.u32 2, %s19
          %s422 = smul.addr %s18, 32
          %s423 = sadd.s32 %s421, %s422
          %s424 = smul.addr %s423, 8
          %s425 = scalar_lea.vmem %s3, %s424
          // Predicated region
          $region37: #{deconv3d_pallas.1} parent=35 // pred_check
            _
          $region38: #{deconv3d_pallas.1} parent=35 // pred_check_branch
            %427 = sbr.rel (0) target = $region40
          $region39: #{deconv3d_pallas.1} parent=35 // pred_region
            // Predicated region
            $region41: #{deconv3d_pallas.1} parent=39 // pred_check
              _
            $region42: #{deconv3d_pallas.1} parent=39 // pred_check_branch
              %429 = sbr.rel (0) target = $region44
            $region43: #{deconv3d_pallas.1} parent=39 // pred_region
              loop: start=0, step=1, limit=1
              $region45: #{deconv3d_pallas.1} parent=43 // loop_pre_header
                _
              $region46: #{deconv3d_pallas.1} parent=43 // loop_header
                %s431 = sphi 0, %s435
                %p432 = scmp.ge.s32.totalorder %s431, 1
                %s436 = sphi %s417, %s417
                %s437 = sphi %s425, %s425
              $region47: #{deconv3d_pallas.1} parent=43 // loop_header_branch
                %434 = sbr.rel (%p432) target = $region51
              $region48: #{deconv3d_pallas.1} parent=43 // loop_body
                %v438 = vld [vmem:[%s436] sm:$0xff]
                %439 = vst [vmem:[%s437] sm:$0xff] %v438
                %v440 = vld [vmem:[%s436 + $0x8] sm:$0xff]
                %441 = vst [vmem:[%s437 + $0x8] sm:$0xff] %v440
                %v442 = vld [vmem:[%s436 + $0x10] sm:$0xff]
                %443 = vst [vmem:[%s437 + $0x20] sm:$0xff] %v442
                %v444 = vld [vmem:[%s436 + $0x18] sm:$0xff]
                %445 = vst [vmem:[%s437 + $0x28] sm:$0xff] %v444
                %v446 = vld [vmem:[%s436 + $0x20] sm:$0xff]
                %447 = vst [vmem:[%s437 + $0x40] sm:$0xff] %v446
                %v448 = vld [vmem:[%s436 + $0x28] sm:$0xff]
                %449 = vst [vmem:[%s437 + $0x48] sm:$0xff] %v448
                %v450 = vld [vmem:[%s436 + $0x30] sm:$0xff]
                %451 = vst [vmem:[%s437 + $0x60] sm:$0xff] %v450
                %v452 = vld [vmem:[%s436 + $0x38] sm:$0xff]
                %453 = vst [vmem:[%s437 + $0x68] sm:$0xff] %v452
                %v454 = vld [vmem:[%s436 + $0x40] sm:$0xff]
                %455 = vst [vmem:[%s437 + $0x80] sm:$0xff] %v454
                %v456 = vld [vmem:[%s436 + $0x48] sm:$0xff]
                %457 = vst [vmem:[%s437 + $0x88] sm:$0xff] %v456
                %v458 = vld [vmem:[%s436 + $0x50] sm:$0xff]
                %459 = vst [vmem:[%s437 + $0xa0] sm:$0xff] %v458
                %v460 = vld [vmem:[%s436 + $0x58] sm:$0xff]
                %461 = vst [vmem:[%s437 + $0xa8] sm:$0xff] %v460
                %v462 = vld [vmem:[%s436 + $0x60] sm:$0xff]
                %463 = vst [vmem:[%s437 + $0xc0] sm:$0xff] %v462
                %v464 = vld [vmem:[%s436 + $0x68] sm:$0xff]
                %465 = vst [vmem:[%s437 + $0xc8] sm:$0xff] %v464
                %v466 = vld [vmem:[%s436 + $0x70] sm:$0xff]
                %467 = vst [vmem:[%s437 + $0xe0] sm:$0xff] %v466
                %v468 = vld [vmem:[%s436 + $0x78] sm:$0xff]
                %469 = vst [vmem:[%s437 + $0xe8] sm:$0xff] %v468
              $region49: #{deconv3d_pallas.1} parent=43 // loop_footer
                %s435 = sadd.s32 1, %s431
              $region50: #{deconv3d_pallas.1} parent=43 // loop_footer_branch
                %430 = sbr.rel target = $region46
              $region51: #{deconv3d_pallas.1} parent=43 // loop_exit
                _
            $region44: #{deconv3d_pallas.1} parent=39 // pred_fallthru
              _
            // Predicated region
            $region52: #{deconv3d_pallas.1} parent=39 // pred_check
              _
            $region53: #{deconv3d_pallas.1} parent=39 // pred_check_branch
              %471 = sbr.rel target = $region55
            $region54: #{deconv3d_pallas.1} parent=39 // pred_region
              _
            $region55: #{deconv3d_pallas.1} parent=39 // pred_fallthru
              _
          $region40: #{deconv3d_pallas.1} parent=35 // pred_fallthru
            _
          %472 = vnop
        $region36: #{deconv3d_pallas.1} parent=31 // pred_fallthru
          _
      $region32: #{deconv3d_pallas.1} parent=5 // pred_fallthru
        _
      %p473 = scmp.le.s32.totalorder 2, %s9
      // Predicated region
      $region56: #{deconv3d_pallas.1} parent=5 // pred_check
        %p474 = pneg %p473
      $region57: #{deconv3d_pallas.1} parent=5 // pred_check_branch
        %476 = sbr.rel (%p474) target = $region59
      $region58: #{deconv3d_pallas.1} parent=5 // pred_region
        %s477 = ssub.s32 %s9, 2
        // Predicated region
        $region60: #{deconv3d_pallas.1} parent=58 // pred_check
          %p478 = pneg %p122
        $region61: #{deconv3d_pallas.1} parent=58 // pred_check_branch
          %480 = sbr.rel (%p478) target = $region63
        $region62: #{deconv3d_pallas.1} parent=58 // pred_region
          %s481 = sand.u32 %s107, 1
          %s482 = sand.u32 %s107, 1
          %s483 = smul.addr %s482, 128
          %s484 = scalar_lea.vmem [#allocation2], %s483
        $region63: #{deconv3d_pallas.1} parent=58 // pred_fallthru
          _
      $region59: #{deconv3d_pallas.1} parent=5 // pred_fallthru
        _
    $region6: #{deconv3d_pallas.1} parent=1 // loop_footer
      %s13 = sadd.s32 1, %s9
    $region7: #{deconv3d_pallas.1} parent=1 // loop_footer_branch
      %8 = sbr.rel target = $region3
    $region8: #{deconv3d_pallas.1} parent=1 // loop_exit
      _

</llo_original>
